<compile_context>
chip_gen: v6e
topology: v6e:2x2x1
jax: 0.10.0
libtpu: 0.0.40
codegen_flags: <defaults>
</compile_context>

<pallas_src>
import jax
import jax.numpy as jnp
from jax.experimental import pallas as pl
from jax.experimental.pallas import tpu as pltpu

LANE = 128


def _round_up(n, m):
    return (n + m - 1) // m * m


def ftmlp_kernel(x_ref, selwe_ref, be_ref, w1_ref, b1_ref,
                 w2_ref, b2_ref, wfc_ref, bfc_ref, out_ref):
    x = x_ref[...]                                                    # (TB, F) f32

    # LinearReLUEmbeddings + Flatten, with W_emb folded into the selection
    # matrix:  h[b, f*E+e] = relu(x[b, f] * W_emb[f, e] + b_emb[f, e])
    h = jnp.dot(x, selwe_ref[...], preferred_element_type=jnp.float32)
    h = jnp.maximum(h + be_ref[...], 0.0)                             # (TB, D_PAD)

    # MLP block 1: Linear + ReLU (+ Dropout == identity in eval mode).
    h = jnp.dot(h.astype(jnp.bfloat16), w1_ref[...],
                preferred_element_type=jnp.float32)
    h = jnp.maximum(h + b1_ref[...], 0.0)                             # (TB, d_block)

    # MLP block 2.
    h = jnp.dot(h.astype(jnp.bfloat16), w2_ref[...],
                preferred_element_type=jnp.float32)
    h = jnp.maximum(h + b2_ref[...], 0.0)                             # (TB, d_block)

    # fc head (replaces mlp.output); output padded to 128 lanes (unmasked vst).
    out_ref[...] = (
        jnp.dot(h.astype(jnp.bfloat16), wfc_ref[...],
                preferred_element_type=jnp.float32) + bfc_ref[...])   # (TB, N_PAD)


def ftmlp_forward(x, params, n_classes, *, block_b=512):
    B, F = x.shape
    d_in_pad = params["selwe"].shape[1]
    d_block = params["w1"].shape[1]
    n_pad = params["wfc"].shape[1]

    # Batch tile: multiple of 8 (sublanes); default 512 is MXU-friendly on
    # v5e (128-wide) and v6e/v7x (256-wide) while keeping the per-tile fp32
    # intermediates well inside v7x's 64 MiB VMEM.
    TB = min(block_b, _round_up(max(B, 1), 8))
    Bp = _round_up(B, TB)
    if Bp != B:
        x = jnp.pad(x, ((0, Bp - B), (0, 0)))

    def weight_spec(shape):
        # Full-array block, constant index_map -> weights stay VMEM-resident
        # across grid steps (fetched from HBM once).
        return pl.BlockSpec(shape, lambda i: (0, 0))

    out = pl.pallas_call(
        ftmlp_kernel,
        out_shape=jax.ShapeDtypeStruct((Bp, n_pad), jnp.float32),
        grid=(Bp // TB,),
        in_specs=[
            pl.BlockSpec((TB, F), lambda i: (i, 0)),      # x: batch-tiled
            weight_spec((F, d_in_pad)),                   # sel * W_emb
            weight_spec((1, d_in_pad)),                   # b_emb (flattened)
            weight_spec((d_in_pad, d_block)),             # w1 (bf16)
            weight_spec((1, d_block)),                    # b1
            weight_spec((d_block, d_block)),              # w2 (bf16)
            weight_spec((1, d_block)),                    # b2
            weight_spec((d_block, n_pad)),                # wfc (bf16)
            weight_spec((1, n_pad)),                      # bfc
        ],
        out_specs=pl.BlockSpec((TB, n_pad), lambda i: (i, 0)),
        compiler_params=pltpu.CompilerParams(
            dimension_semantics=("parallel",),
            vmem_limit_bytes=48 * 1024 * 1024,
        ),
    )(x, params["selwe"], params["be"], params["w1"], params["b1"],
      params["w2"], params["b2"], params["wfc"], params["bfc"])

    return out[:B, :n_classes]


def init_params(key, input_dim, embedding_dim, d_block, n_classes):
    F, E = input_dim, embedding_dim
    d_in = F * E
    d_in_pad = _round_up(d_in, LANE)          # 192 -> 256
    n_pad = _round_up(n_classes, LANE)        # 3   -> 128
    ks = jax.random.split(key, 8)

    def unif(k, shape, bound):
        return jax.random.uniform(k, shape, jnp.float32, -bound, bound)

    # LinearEmbeddings params (F, E), flattened along the feature axis.
    we = unif(ks[0], (F, E), 1.0 / (E ** 0.5)).reshape(1, d_in)
    be = unif(ks[1], (F, E), 1.0 / (E ** 0.5)).reshape(1, d_in)
    # MLP block linears stored pre-transposed as (in, out).
    w1 = unif(ks[2], (d_in, d_block), 1.0 / (d_in ** 0.5))
    b1 = unif(ks[3], (1, d_block), 1.0 / (d_in ** 0.5))
    w2 = unif(ks[4], (d_block, d_block), 1.0 / (d_block ** 0.5))
    b2 = unif(ks[5], (1, d_block), 1.0 / (d_block ** 0.5))
    # fc head: Linear(d_block, n_classes), pre-transposed.
    wfc = unif(ks[6], (d_block, n_classes), 1.0 / (d_block ** 0.5))
    bfc = unif(ks[7], (1, n_classes), 1.0 / (d_block ** 0.5))

    # 0/1 selection matrix implementing x[b, f] -> (b, f*E + e), with W_emb
    # folded in (each one-hot column f*E+e scaled by W_emb[f, e]).
    sel = jnp.repeat(jnp.eye(F, dtype=jnp.float32), E, axis=1)        # (F, F*E)
    selwe = sel * we                                                  # (F, F*E)

    # Zero-pad to lane-dense shapes; zeros in sel/be columns + zero rows in w1
    # + zero cols in wfc/bfc keep the math identical.
    selwe = jnp.pad(selwe, ((0, 0), (0, d_in_pad - d_in)))
    be = jnp.pad(be, ((0, 0), (0, d_in_pad - d_in)))
    w1 = jnp.pad(w1, ((0, d_in_pad - d_in), (0, 0)))
    wfc = jnp.pad(wfc, ((0, 0), (0, n_pad - n_classes)))
    bfc = jnp.pad(bfc, ((0, 0), (0, n_pad - n_classes)))

    return dict(selwe=selwe, be=be,
                w1=w1.astype(jnp.bfloat16), b1=b1,
                w2=w2.astype(jnp.bfloat16), b2=b2,
                wfc=wfc.astype(jnp.bfloat16), bfc=bfc)


def ftmlp_reference(x, params, n_classes):
    # Pure-JAX fp32 reference on the same (padded, bf16-stored) parameters.
    h = jnp.maximum(x @ params["selwe"] + params["be"], 0.0)
    h = jnp.maximum(h @ params["w1"].astype(jnp.float32) + params["b1"], 0.0)
    h = jnp.maximum(h @ params["w2"].astype(jnp.float32) + params["b2"], 0.0)
    out = h @ params["wfc"].astype(jnp.float32) + params["bfc"]
    return out[:, :n_classes]


if __name__ == "__main__":
    B, F, E = 8, 8, 24            # batch, input_dim, embedding_dim
    d_block, n_classes = 256, 3   # n_blocks = 2 (unrolled in the kernel)

    key = jax.random.PRNGKey(0)
    kx, kp = jax.random.split(key)
    x = jax.random.normal(kx, (B, F), jnp.float32)
    params = init_params(kp, F, E, d_block, n_classes)

    out = jax.block_until_ready(ftmlp_forward(x, params, n_classes))
    ref = ftmlp_reference(x, params, n_classes)
    assert out.shape == (B, n_classes)
    err = float(jnp.max(jnp.abs(out - ref)))
    assert jnp.allclose(out, ref, atol=5e-3, rtol=5e-2), err
    print("KERNEL_OK")
</pallas_src>

<mosaic_0001>
module attributes {stable_mosaic.version = 11 : i64} {
  func.func @ftmlp_kernel(%arg0: i32, %arg1: memref<8x8xf32, #tpu.memory_space<vmem>>, %arg2: memref<8x256xf32, #tpu.memory_space<vmem>>, %arg3: memref<1x256xf32, #tpu.memory_space<vmem>>, %arg4: memref<256x256xbf16, #tpu.memory_space<vmem>>, %arg5: memref<1x256xf32, #tpu.memory_space<vmem>>, %arg6: memref<256x256xbf16, #tpu.memory_space<vmem>>, %arg7: memref<1x256xf32, #tpu.memory_space<vmem>>, %arg8: memref<256x128xbf16, #tpu.memory_space<vmem>>, %arg9: memref<1x128xf32, #tpu.memory_space<vmem>>, %arg10: memref<8x128xf32, #tpu.memory_space<vmem>>) attributes {dimension_semantics = [#tpu.dimension_semantics<parallel>], iteration_bounds = array<i64: 1>, scalar_prefetch = 0 : i64, scratch_operands = 0 : i64, tpu.core_type = #tpu.core_type<tc>, window_params = [{transform_indices = @transform_0, window_bounds = array<i64: 8, 8>}, {pipeline_mode = #tpu.pipeline_mode<synchronous>, transform_indices = @transform_1, window_bounds = array<i64: 8, 256>}, {pipeline_mode = #tpu.pipeline_mode<synchronous>, transform_indices = @transform_2, window_bounds = array<i64: 1, 256>}, {pipeline_mode = #tpu.pipeline_mode<synchronous>, transform_indices = @transform_3, window_bounds = array<i64: 256, 256>}, {pipeline_mode = #tpu.pipeline_mode<synchronous>, transform_indices = @transform_4, window_bounds = array<i64: 1, 256>}, {pipeline_mode = #tpu.pipeline_mode<synchronous>, transform_indices = @transform_5, window_bounds = array<i64: 256, 256>}, {pipeline_mode = #tpu.pipeline_mode<synchronous>, transform_indices = @transform_6, window_bounds = array<i64: 1, 256>}, {pipeline_mode = #tpu.pipeline_mode<synchronous>, transform_indices = @transform_7, window_bounds = array<i64: 256, 128>}, {pipeline_mode = #tpu.pipeline_mode<synchronous>, transform_indices = @transform_8, window_bounds = array<i64: 1, 128>}, {transform_indices = @transform_9, window_bounds = array<i64: 8, 128>}]} {
    %c0 = arith.constant 0 : index
    %c0_0 = arith.constant 0 : index
    %0 = vector.load %arg1[%c0, %c0_0] : memref<8x8xf32, #tpu.memory_space<vmem>>, vector<8x8xf32>
    %c0_1 = arith.constant 0 : index
    %c0_2 = arith.constant 0 : index
    %1 = vector.load %arg2[%c0_1, %c0_2] : memref<8x256xf32, #tpu.memory_space<vmem>>, vector<8x256xf32>
    %cst = arith.constant dense<0.000000e+00> : vector<8x256xf32>
    %2 = tpu.matmul %0, %1, %cst {dimension_numbers = #tpu.dot_dimension_numbers<[1], [0], [0], [1], [0, 0, 1, 1], [], []>} : vector<8x8xf32>, vector<8x256xf32>, vector<8x256xf32> -> vector<8x256xf32>
    %c0_3 = arith.constant 0 : index
    %c0_4 = arith.constant 0 : index
    %3 = vector.load %arg3[%c0_3, %c0_4] : memref<1x256xf32, #tpu.memory_space<vmem>>, vector<1x256xf32>
    %4 = vector.broadcast %3 : vector<1x256xf32> to vector<8x256xf32>
    %5 = arith.addf %2, %4 : vector<8x256xf32>
    %cst_5 = arith.constant 0.000000e+00 : f32
    %6 = vector.broadcast %cst_5 : f32 to vector<8x256xf32>
    %7 = arith.maximumf %5, %6 : vector<8x256xf32>
    %8 = arith.truncf %7 : vector<8x256xf32> to vector<8x256xbf16>
    %c0_6 = arith.constant 0 : index
    %c0_7 = arith.constant 0 : index
    %9 = vector.load %arg4[%c0_6, %c0_7] : memref<256x256xbf16, #tpu.memory_space<vmem>>, vector<256x256xbf16>
    %cst_8 = arith.constant dense<0.000000e+00> : vector<8x256xf32>
    %10 = tpu.matmul %8, %9, %cst_8 {dimension_numbers = #tpu.dot_dimension_numbers<[1], [0], [0], [1], [0, 0, 1, 1], [], []>} : vector<8x256xbf16>, vector<256x256xbf16>, vector<8x256xf32> -> vector<8x256xf32>
    %c0_9 = arith.constant 0 : index
    %c0_10 = arith.constant 0 : index
    %11 = vector.load %arg5[%c0_9, %c0_10] : memref<1x256xf32, #tpu.memory_space<vmem>>, vector<1x256xf32>
    %12 = vector.broadcast %11 : vector<1x256xf32> to vector<8x256xf32>
    %13 = arith.addf %10, %12 : vector<8x256xf32>
    %cst_11 = arith.constant 0.000000e+00 : f32
    %14 = vector.broadcast %cst_11 : f32 to vector<8x256xf32>
    %15 = arith.maximumf %13, %14 : vector<8x256xf32>
    %16 = arith.truncf %15 : vector<8x256xf32> to vector<8x256xbf16>
    %c0_12 = arith.constant 0 : index
    %c0_13 = arith.constant 0 : index
    %17 = vector.load %arg6[%c0_12, %c0_13] : memref<256x256xbf16, #tpu.memory_space<vmem>>, vector<256x256xbf16>
    %cst_14 = arith.constant dense<0.000000e+00> : vector<8x256xf32>
    %18 = tpu.matmul %16, %17, %cst_14 {dimension_numbers = #tpu.dot_dimension_numbers<[1], [0], [0], [1], [0, 0, 1, 1], [], []>} : vector<8x256xbf16>, vector<256x256xbf16>, vector<8x256xf32> -> vector<8x256xf32>
    %c0_15 = arith.constant 0 : index
    %c0_16 = arith.constant 0 : index
    %19 = vector.load %arg7[%c0_15, %c0_16] : memref<1x256xf32, #tpu.memory_space<vmem>>, vector<1x256xf32>
    %20 = vector.broadcast %19 : vector<1x256xf32> to vector<8x256xf32>
    %21 = arith.addf %18, %20 : vector<8x256xf32>
    %cst_17 = arith.constant 0.000000e+00 : f32
    %22 = vector.broadcast %cst_17 : f32 to vector<8x256xf32>
    %23 = arith.maximumf %21, %22 : vector<8x256xf32>
    %24 = arith.truncf %23 : vector<8x256xf32> to vector<8x256xbf16>
    %c0_18 = arith.constant 0 : index
    %c0_19 = arith.constant 0 : index
    %25 = vector.load %arg8[%c0_18, %c0_19] : memref<256x128xbf16, #tpu.memory_space<vmem>>, vector<256x128xbf16>
    %cst_20 = arith.constant dense<0.000000e+00> : vector<8x128xf32>
    %26 = tpu.matmul %24, %25, %cst_20 {dimension_numbers = #tpu.dot_dimension_numbers<[1], [0], [0], [1], [0, 0, 1, 1], [], []>} : vector<8x256xbf16>, vector<256x128xbf16>, vector<8x128xf32> -> vector<8x128xf32>
    %c0_21 = arith.constant 0 : index
    %c0_22 = arith.constant 0 : index
    %27 = vector.load %arg9[%c0_21, %c0_22] : memref<1x128xf32, #tpu.memory_space<vmem>>, vector<1x128xf32>
    %28 = vector.broadcast %27 : vector<1x128xf32> to vector<8x128xf32>
    %29 = arith.addf %26, %28 : vector<8x128xf32>
    %c0_23 = arith.constant 0 : index
    %c0_24 = arith.constant 0 : index
    %30 = vector.load %arg10[%c0_23, %c0_24] : memref<8x128xf32, #tpu.memory_space<vmem>>, vector<8x128xf32>
    tpu.vector_store %arg10[%c0_23, %c0_24], %29 {strides = array<i32>} : memref<8x128xf32, #tpu.memory_space<vmem>>, vector<8x128xf32>,
    return
  }
  func.func @transform_0(%arg0: i32) -> (i32, i32) {
    %c0_i32 = arith.constant 0 : i32
    %c0_i32_0 = arith.constant 0 : i32
    return %arg0, %c0_i32 : i32, i32
  }
  func.func @transform_1(%arg0: i32) -> (i32, i32) {
    %c0_i32 = arith.constant 0 : i32
    %c0_i32_0 = arith.constant 0 : i32
    %c0_i32_1 = arith.constant 0 : i32
    return %c0_i32, %c0_i32_0 : i32, i32
  }
  func.func @transform_2(%arg0: i32) -> (i32, i32) {
    %c0_i32 = arith.constant 0 : i32
    %c0_i32_0 = arith.constant 0 : i32
    %c0_i32_1 = arith.constant 0 : i32
    return %c0_i32, %c0_i32_0 : i32, i32
  }
  func.func @transform_3(%arg0: i32) -> (i32, i32) {
    %c0_i32 = arith.constant 0 : i32
    %c0_i32_0 = arith.constant 0 : i32
    %c0_i32_1 = arith.constant 0 : i32
    return %c0_i32, %c0_i32_0 : i32, i32
  }
  func.func @transform_4(%arg0: i32) -> (i32, i32) {
    %c0_i32 = arith.constant 0 : i32
    %c0_i32_0 = arith.constant 0 : i32
    %c0_i32_1 = arith.constant 0 : i32
    return %c0_i32, %c0_i32_0 : i32, i32
  }
  func.func @transform_5(%arg0: i32) -> (i32, i32) {
    %c0_i32 = arith.constant 0 : i32
    %c0_i32_0 = arith.constant 0 : i32
    %c0_i32_1 = arith.constant 0 : i32
    return %c0_i32, %c0_i32_0 : i32, i32
  }
  func.func @transform_6(%arg0: i32) -> (i32, i32) {
    %c0_i32 = arith.constant 0 : i32
    %c0_i32_0 = arith.constant 0 : i32
    %c0_i32_1 = arith.constant 0 : i32
    return %c0_i32, %c0_i32_0 : i32, i32
  }
  func.func @transform_7(%arg0: i32) -> (i32, i32) {
    %c0_i32 = arith.constant 0 : i32
    %c0_i32_0 = arith.constant 0 : i32
    %c0_i32_1 = arith.constant 0 : i32
    return %c0_i32, %c0_i32_0 : i32, i32
  }
  func.func @transform_8(%arg0: i32) -> (i32, i32) {
    %c0_i32 = arith.constant 0 : i32
    %c0_i32_0 = arith.constant 0 : i32
    %c0_i32_1 = arith.constant 0 : i32
    return %c0_i32, %c0_i32_0 : i32, i32
  }
  func.func @transform_9(%arg0: i32) -> (i32, i32) {
    %c0_i32 = arith.constant 0 : i32
    %c0_i32_0 = arith.constant 0 : i32
    return %arg0, %c0_i32 : i32, i32
  }
}

</mosaic_0001>

<llo_original>
// kernel: tpu_custom_call.1
$region0: #{tpu_custom_call.1}
  #allocation0 [shape = 'u32[]', space=smem, size = 0x4, offset = 0x4, fixed_abs, tag = 'smem constant byte address 0x4 - core index']
  #allocation1 [shape = 'u32[144,128]{1,0:T(1,128)}', space=vmem, size = 0x12000, scoped, tag = 'internal scratch']
  %s0 = inlined_call_operand.hbm [shape: f32[8,8], index: 0, kind: input, shape index: {}]
  %s1 = inlined_call_operand.hbm [shape: f32[8,256], index: 1, kind: input, shape index: {}]
  %s2 = inlined_call_operand.vmem [shape: f32[1,256], index: 2, kind: input, shape index: {}]
  %s3 = inlined_call_operand.hbm [shape: bf16[256,256], index: 3, kind: input, shape index: {}]
  %s4 = inlined_call_operand.vmem [shape: f32[1,256], index: 4, kind: input, shape index: {}]
  %s5 = inlined_call_operand.hbm [shape: bf16[256,256], index: 5, kind: input, shape index: {}]
  %s6 = inlined_call_operand.vmem [shape: f32[1,256], index: 6, kind: input, shape index: {}]
  %s7 = inlined_call_operand.hbm [shape: bf16[256,128], index: 7, kind: input, shape index: {}]
  %s8 = inlined_call_operand.vmem [shape: f32[1,128], index: 8, kind: input, shape index: {}]
  %s9 = inlined_call_operand.hbm [shape: f32[8,128], index: 9, kind: output, shape index: {}]
  %s10 = sld [smem:[#allocation0]]
  $region66: #{tpu_custom_call.1} parent=0
    _
  %s12 = ssub.s32 1, %s10
  %s13 = scalar_select 0, %s12, %s10
  $region1: #{tpu_custom_call.1} parent=0
    #allocation2 [shape = 'u8[4096]{0}', space=vmem, size = 0x1000, scoped, tag = 'input window, operand 0, single buffered']
    #allocation3 [shape = 's32[1]{0}', space=sflag, size = 0x4, scoped, tag = 'scoped memory for tpu_custom_call.1']
    #allocation4 [shape = 's32[1]{0}', space=sflag, size = 0x4, scoped, tag = 'scoped memory for tpu_custom_call.1']
    #allocation5 [shape = 'u8[8192]{0}', space=vmem, size = 0x2000, scoped, tag = 'input window, operand 1, single buffered']
    #allocation6 [shape = 's32[1]{0}', space=sflag, size = 0x4, scoped, tag = 'scoped memory for tpu_custom_call.1']
    #allocation7 [shape = 'u8[131072]{0}', space=vmem, size = 0x20000, scoped, tag = 'input window, operand 3, single buffered']
    #allocation8 [shape = 'u8[131072]{0}', space=vmem, size = 0x20000, scoped, tag = 'input window, operand 5, single buffered']
    #allocation9 [shape = 's32[1]{0}', space=sflag, size = 0x4, scoped, tag = 'scoped memory for tpu_custom_call.1']
    #allocation10 [shape = 'u8[65536]{0}', space=vmem, size = 0x10000, scoped, tag = 'input window, operand 7, single buffered']
    #allocation11 [shape = 'u8[4096]{0}', space=vmem, size = 0x1000, scoped, tag = 'output window, operand 0, single buffered']
    %14 = vsyncpa [#allocation3], 0
    %15 = vsyncpa [#allocation6], 0
    %16 = vsyncpa [#allocation9], 0
    %17 = vsyncpa [#allocation4], 0
    // Predicated region
    $region2: #{tpu_custom_call.1} parent=1 // pred_check
      _
    $region3: #{tpu_custom_call.1} parent=1 // pred_check_branch
      %19 = sbr.rel (0) target = $region5
    $region4: #{tpu_custom_call.1} parent=1 // pred_region
      %s21 = ssub.s32 128, 128
      %22 = vsyncadd [#allocation3], %s21
      %s24 = sshll.u32 [#allocation2], 4
      %s25 = int_to_ptr.vmem [resolvable:$true] %s24
      %27 = dma.hbm_to_vmem [thread:$0]  %s0, 128, %s25, [#allocation3]
    $region5: #{tpu_custom_call.1} parent=1 // pred_fallthru
      _
    // Predicated region
    $region6: #{tpu_custom_call.1} parent=1 // pred_check
      _
    $region7: #{tpu_custom_call.1} parent=1 // pred_check_branch
      %29 = sbr.rel (0) target = $region9
    $region8: #{tpu_custom_call.1} parent=1 // pred_region
      %s31 = ssub.s32 256, 256
      %32 = vsyncadd [#allocation6], %s31
      %s34 = sshll.u32 [#allocation5], 4
      %s35 = int_to_ptr.vmem [resolvable:$true] %s34
      %37 = dma.hbm_to_vmem [thread:$0]  %s1, 256, %s35, [#allocation6]
    $region9: #{tpu_custom_call.1} parent=1 // pred_fallthru
      _
    // Predicated region
    $region10: #{tpu_custom_call.1} parent=1 // pred_check
      _
    $region11: #{tpu_custom_call.1} parent=1 // pred_check_branch
      %39 = sbr.rel (0) target = $region13
    $region12: #{tpu_custom_call.1} parent=1 // pred_region
      _
    $region13: #{tpu_custom_call.1} parent=1 // pred_fallthru
      _
    // Predicated region
    $region14: #{tpu_custom_call.1} parent=1 // pred_check
      _
    $region15: #{tpu_custom_call.1} parent=1 // pred_check_branch
      %41 = sbr.rel (0) target = $region17
    $region16: #{tpu_custom_call.1} parent=1 // pred_region
      %s43 = ssub.s32 4096, 4096
      %44 = vsyncadd [#allocation6], %s43
      %s45 = sshll.u32 [#allocation7], 4
      %s46 = int_to_ptr.vmem [resolvable:$true] %s45
      %51 = dma.hbm_to_vmem [thread:$0]  %s3, 4096, %s46, [#allocation6], 128, 128, 8
    $region17: #{tpu_custom_call.1} parent=1 // pred_fallthru
      _
    // Predicated region
    $region18: #{tpu_custom_call.1} parent=1 // pred_check
      _
    $region19: #{tpu_custom_call.1} parent=1 // pred_check_branch
      %53 = sbr.rel (0) target = $region21
    $region20: #{tpu_custom_call.1} parent=1 // pred_region
      _
    $region21: #{tpu_custom_call.1} parent=1 // pred_fallthru
      _
    // Predicated region
    $region22: #{tpu_custom_call.1} parent=1 // pred_check
      _
    $region23: #{tpu_custom_call.1} parent=1 // pred_check_branch
      %55 = sbr.rel (0) target = $region25
    $region24: #{tpu_custom_call.1} parent=1 // pred_region
      %s57 = ssub.s32 4096, 4096
      %58 = vsyncadd [#allocation9], %s57
      %s59 = sshll.u32 [#allocation8], 4
      %s60 = int_to_ptr.vmem [resolvable:$true] %s59
      %65 = dma.hbm_to_vmem [thread:$0]  %s5, 4096, %s60, [#allocation9], 128, 128, 8
    $region25: #{tpu_custom_call.1} parent=1 // pred_fallthru
      _
    // Predicated region
    $region26: #{tpu_custom_call.1} parent=1 // pred_check
      _
    $region27: #{tpu_custom_call.1} parent=1 // pred_check_branch
      %67 = sbr.rel (0) target = $region29
    $region28: #{tpu_custom_call.1} parent=1 // pred_region
      _
    $region29: #{tpu_custom_call.1} parent=1 // pred_fallthru
      _
    // Predicated region
    $region30: #{tpu_custom_call.1} parent=1 // pred_check
      _
    $region31: #{tpu_custom_call.1} parent=1 // pred_check_branch
      %69 = sbr.rel (0) target = $region33
    $region32: #{tpu_custom_call.1} parent=1 // pred_region
      %s71 = ssub.s32 2048, 2048
      %72 = vsyncadd [#allocation9], %s71
      %s73 = sshll.u32 [#allocation10], 4
      %s74 = int_to_ptr.vmem [resolvable:$true] %s73
      %79 = dma.hbm_to_vmem [thread:$0]  %s7, 2048, %s74, [#allocation9], 64, 64, 4
    $region33: #{tpu_custom_call.1} parent=1 // pred_fallthru
      _
    // Predicated region
    $region34: #{tpu_custom_call.1} parent=1 // pred_check
      _
    $region35: #{tpu_custom_call.1} parent=1 // pred_check_branch
      %81 = sbr.rel (0) target = $region37
    $region36: #{tpu_custom_call.1} parent=1 // pred_region
      _
    $region37: #{tpu_custom_call.1} parent=1 // pred_fallthru
      _
    // Predicated region
    $region38: #{tpu_custom_call.1} parent=1 // pred_check
      _
    $region39: #{tpu_custom_call.1} parent=1 // pred_check_branch
      %83 = sbr.rel (0) target = $region41
    $region40: #{tpu_custom_call.1} parent=1 // pred_region
      %84 = dma.done [#allocation3], 128
    $region41: #{tpu_custom_call.1} parent=1 // pred_fallthru
      _
    // Predicated region
    $region42: #{tpu_custom_call.1} parent=1 // pred_check
      _
    $region43: #{tpu_custom_call.1} parent=1 // pred_check_branch
      %86 = sbr.rel (0) target = $region45
    $region44: #{tpu_custom_call.1} parent=1 // pred_region
      %87 = dma.done [#allocation6], 256
    $region45: #{tpu_custom_call.1} parent=1 // pred_fallthru
      _
    // Predicated region
    $region46: #{tpu_custom_call.1} parent=1 // pred_check
      _
    $region47: #{tpu_custom_call.1} parent=1 // pred_check_branch
      %89 = sbr.rel (0) target = $region49
    $region48: #{tpu_custom_call.1} parent=1 // pred_region
      %90 = dma.done [#allocation6], 4096
    $region49: #{tpu_custom_call.1} parent=1 // pred_fallthru
      _
    // Predicated region
    $region50: #{tpu_custom_call.1} parent=1 // pred_check
      _
    $region51: #{tpu_custom_call.1} parent=1 // pred_check_branch
      %92 = sbr.rel (0) target = $region53
    $region52: #{tpu_custom_call.1} parent=1 // pred_region
      %93 = dma.done [#allocation9], 4096
    $region53: #{tpu_custom_call.1} parent=1 // pred_fallthru
      _
    // Predicated region
    $region54: #{tpu_custom_call.1} parent=1 // pred_check
      _
    $region55: #{tpu_custom_call.1} parent=1 // pred_check_branch
      %95 = sbr.rel (0) target = $region57
    $region56: #{tpu_custom_call.1} parent=1 // pred_region
      %96 = dma.done [#allocation9], 2048
    $region57: #{tpu_custom_call.1} parent=1 // pred_fallthru
      _
    %v98 = vld [vmem:[#allocation2] sm:$0xff]
    %v99 = vld [vmem:[#allocation5] sm:$0xff]
    %v100 = vld [vmem:[#allocation5 + $0x8] sm:$0xff]
    %v101 = vld [vmem:[%s2] sm:$0x3]
    %v103 = vlaneseq
    %v104 = vshrl.u32 %v103, 7
    %v105 = vsub.s32 0, %v104
    %v106 = vrot.slane %v101, %v105
    %v107 = vlaneseq
    %v108 = vshrl.u32 %v107, 7
    %v109 = vsub.s32 1, %v108
    %v110 = vrot.slane %v101, %v109
    %vm113 = vcmask 64512
    %v115 = vsel %vm113, %v98, 0
    %117 = vmatprep.subr.mxu0 0.0
    %118 = vmatpush1.msra.mxu0 0.0
    %119 = vmatprep.subr.mxu0 0.0
    %120 = vmatpush1.msra.mxu0 0.0
    %121 = vmatprep.subr.mxu0 0.0
    %122 = vmatpush1.msra.mxu0 0.0
    %123 = vmatprep.subr.mxu0 0.0
    %124 = vmatpush1.msra.mxu0 0.0
    %125 = vmatprep.subr.mxu0 0.0
    %126 = vmatpush1.msra.mxu0 0.0
    %127 = vmatprep.subr.mxu0 0.0
    %128 = vmatpush1.msra.mxu0 0.0
    %129 = vmatprep.subr.mxu0 0.0
    %130 = vmatpush1.msra.mxu0 0.0
    %131 = vmatprep.subr.mxu0 0.0
    %132 = vmatpush1.msra.mxu0 0.0
    %133 = vmatprep.subr.mxu0 0.0
    %134 = vmatpush1.msra.mxu0 0.0
    %135 = vmatprep.subr.mxu0 0.0
    %136 = vmatpush1.msra.mxu0 0.0
    %137 = vmatprep.subr.mxu0 0.0
    %138 = vmatpush1.msra.mxu0 0.0
    %139 = vmatprep.subr.mxu0 0.0
    %140 = vmatpush1.msra.mxu0 0.0
    %141 = vmatprep.subr.mxu0 0.0
    %142 = vmatpush1.msra.mxu0 0.0
    %143 = vmatprep.subr.mxu0 0.0
    %144 = vmatpush1.msra.mxu0 0.0
    %145 = vmatprep.subr.mxu0 0.0
    %146 = vmatpush1.msra.mxu0 0.0
    %147 = vmatprep.subr.mxu0 %v100
    %148 = vmatpush1.msra.mxu0 %v99
    %149 = vmatprep.subr.mxu0 0.0
    %150 = vmatpush2.msra.mxu0 0.0
    %151 = vmatprep.subr.mxu0 0.0
    %152 = vmatpush2.msra.mxu0 0.0
    %153 = vmatprep.subr.mxu0 0.0
    %154 = vmatpush2.msra.mxu0 0.0
    %155 = vmatprep.subr.mxu0 0.0
    %156 = vmatpush2.msra.mxu0 0.0
    %157 = vmatprep.subr.mxu0 0.0
    %158 = vmatpush2.msra.mxu0 0.0
    %159 = vmatprep.subr.mxu0 0.0
    %160 = vmatpush2.msra.mxu0 0.0
    %161 = vmatprep.subr.mxu0 0.0
    %162 = vmatpush2.msra.mxu0 0.0
    %163 = vmatprep.subr.mxu0 0.0
    %164 = vmatpush2.msra.mxu0 0.0
    %165 = vmatprep.subr.mxu0 0.0
    %166 = vmatpush2.msra.mxu0 0.0
    %167 = vmatprep.subr.mxu0 0.0
    %168 = vmatpush2.msra.mxu0 0.0
    %169 = vmatprep.subr.mxu0 0.0
    %170 = vmatpush2.msra.mxu0 0.0
    %171 = vmatprep.subr.mxu0 0.0
    %172 = vmatpush2.msra.mxu0 0.0
    %173 = vmatprep.subr.mxu0 0.0
    %174 = vmatpush2.msra.mxu0 0.0
    %175 = vmatprep.subr.mxu0 0.0
    %176 = vmatpush2.msra.mxu0 0.0
    %177 = vmatprep.subr.mxu0 0.0
    %178 = vmatpush2.msra.mxu0 0.0
    %179 = vmatprep.subr.mxu0 0.0
    %180 = vmatpush2.msra.mxu0 0.0
    %181 = vmatprep.mubr.f32.mxu0 0.0
    %182 = vmatmul.mubr.f32.gmra.mxu0 %v115
    %v183 = vpop.f32.mrf.mxu0
    %v184 = vadd.f32 %v106, %v183
    %v185 = vpop.f32.mrf.mxu0
    %v186 = vadd.f32 %v110, %v185
    %187 = vdwg.mxu0
    %v188 = vmax.f32 %v184, 0.0
    %v189 = vmax.f32 %v186, 0.0
    %v190 = vpack.c.bf16 %v188, %v188
    %v191 = vpack.c.bf16 %v189, %v189
    %v192 = vld [vmem:[#allocation7] sm:$0xff]
    %v193 = vld [vmem:[#allocation7 + $0x8] sm:$0xff]
    %v194 = vld [vmem:[#allocation7 + $0x10] sm:$0xff]
    %v195 = vld [vmem:[#allocation7 + $0x18] sm:$0xff]
    %v196 = vld [vmem:[#allocation7 + $0x20] sm:$0xff]
    %v197 = vld [vmem:[#allocation7 + $0x28] sm:$0xff]
    %v198 = vld [vmem:[#allocation7 + $0x30] sm:$0xff]
    %v199 = vld [vmem:[#allocation7 + $0x38] sm:$0xff]
    %v200 = vld [vmem:[#allocation7 + $0x40] sm:$0xff]
    %v201 = vld [vmem:[#allocation7 + $0x48] sm:$0xff]
    %v202 = vld [vmem:[#allocation7 + $0x50] sm:$0xff]
    %v203 = vld [vmem:[#allocation7 + $0x58] sm:$0xff]
    %v204 = vld [vmem:[#allocation7 + $0x60] sm:$0xff]
    %v205 = vld [vmem:[#allocation7 + $0x68] sm:$0xff]
    %v206 = vld [vmem:[#allocation7 + $0x70] sm:$0xff]
    %v207 = vld [vmem:[#allocation7 + $0x78] sm:$0xff]
    %v208 = vld [vmem:[#allocation7 + $0x80] sm:$0xff]
    %v209 = vld [vmem:[#allocation7 + $0x88] sm:$0xff]
    %v210 = vld [vmem:[#allocation7 + $0x90] sm:$0xff]
    %v211 = vld [vmem:[#allocation7 + $0x98] sm:$0xff]
    %v212 = vld [vmem:[#allocation7 + $0xa0] sm:$0xff]
    %v213 = vld [vmem:[#allocation7 + $0xa8] sm:$0xff]
    %v214 = vld [vmem:[#allocation7 + $0xb0] sm:$0xff]
    %v215 = vld [vmem:[#allocation7 + $0xb8] sm:$0xff]
    %v216 = vld [vmem:[#allocation7 + $0xc0] sm:$0xff]
    %v217 = vld [vmem:[#allocation7 + $0xc8] sm:$0xff]
    %v218 = vld [vmem:[#allocation7 + $0xd0] sm:$0xff]
    %v219 = vld [vmem:[#allocation7 + $0xd8] sm:$0xff]
    %v220 = vld [vmem:[#allocation7 + $0xe0] sm:$0xff]
    %v221 = vld [vmem:[#allocation7 + $0xe8] sm:$0xff]
    %v222 = vld [vmem:[#allocation7 + $0xf0] sm:$0xff]
    %v223 = vld [vmem:[#allocation7 + $0xf8] sm:$0xff]
    %v224 = vld [vmem:[%s4] sm:$0x3]
    %v226 = vlaneseq
    %v227 = vshrl.u32 %v226, 7
    %v228 = vsub.s32 0, %v227
    %v229 = vrot.slane %v224, %v228
    %v230 = vlaneseq
    %v231 = vshrl.u32 %v230, 7
    %v232 = vsub.s32 1, %v231
    %v233 = vrot.slane %v224, %v232
    %v268 = vunpack.c.l.b16 %v192
    %v269 = vunpack.c.h.b16 %v192
    %v270 = vunpack.c.l.b16 %v193
    %v271 = vunpack.c.h.b16 %v193
    %v272 = vunpack.c.l.b16 %v194
    %v273 = vunpack.c.h.b16 %v194
    %v274 = vunpack.c.l.b16 %v195
    %v275 = vunpack.c.h.b16 %v195
    %v276 = vunpack.c.l.b16 %v196
    %v277 = vunpack.c.h.b16 %v196
    %v278 = vunpack.c.l.b16 %v197
    %v279 = vunpack.c.h.b16 %v197
    %v280 = vunpack.c.l.b16 %v198
    %v281 = vunpack.c.h.b16 %v198
    %v282 = vunpack.c.l.b16 %v199
    %v283 = vunpack.c.h.b16 %v199
    %v284 = vunpack.c.l.b16 %v200
    %v285 = vunpack.c.h.b16 %v200
    %v286 = vunpack.c.l.b16 %v201
    %v287 = vunpack.c.h.b16 %v201
    %v288 = vunpack.c.l.b16 %v202
    %v289 = vunpack.c.h.b16 %v202
    %v290 = vunpack.c.l.b16 %v203
    %v291 = vunpack.c.h.b16 %v203
    %v292 = vunpack.c.l.b16 %v204
    %v293 = vunpack.c.h.b16 %v204
    %v294 = vunpack.c.l.b16 %v205
    %v295 = vunpack.c.h.b16 %v205
    %v296 = vunpack.c.l.b16 %v206
    %v297 = vunpack.c.h.b16 %v206
    %v298 = vunpack.c.l.b16 %v207
    %v299 = vunpack.c.h.b16 %v207
    %v300 = vunpack.c.l.b16 %v208
    %v301 = vunpack.c.h.b16 %v208
    %v302 = vunpack.c.l.b16 %v209
    %v303 = vunpack.c.h.b16 %v209
    %v304 = vunpack.c.l.b16 %v210
    %v305 = vunpack.c.h.b16 %v210
    %v306 = vunpack.c.l.b16 %v211
    %v307 = vunpack.c.h.b16 %v211
    %v308 = vunpack.c.l.b16 %v212
    %v309 = vunpack.c.h.b16 %v212
    %v310 = vunpack.c.l.b16 %v213
    %v311 = vunpack.c.h.b16 %v213
    %v312 = vunpack.c.l.b16 %v214
    %v313 = vunpack.c.h.b16 %v214
    %v314 = vunpack.c.l.b16 %v215
    %v315 = vunpack.c.h.b16 %v215
    %v316 = vunpack.c.l.b16 %v216
    %v317 = vunpack.c.h.b16 %v216
    %v318 = vunpack.c.l.b16 %v217
    %v319 = vunpack.c.h.b16 %v217
    %v320 = vunpack.c.l.b16 %v218
    %v321 = vunpack.c.h.b16 %v218
    %v322 = vunpack.c.l.b16 %v219
    %v323 = vunpack.c.h.b16 %v219
    %v324 = vunpack.c.l.b16 %v220
    %v325 = vunpack.c.h.b16 %v220
    %v326 = vunpack.c.l.b16 %v221
    %v327 = vunpack.c.h.b16 %v221
    %v328 = vunpack.c.l.b16 %v222
    %v329 = vunpack.c.h.b16 %v222
    %v330 = vunpack.c.l.b16 %v223
    %v331 = vunpack.c.h.b16 %v223
    %v332 = vpack.c.b16 %v270, %v268
    %v333 = vpack.c.b16 %v271, %v269
    %v334 = vpack.c.b16 %v274, %v272
    %v335 = vpack.c.b16 %v275, %v273
    %v336 = vpack.c.b16 %v278, %v276
    %v337 = vpack.c.b16 %v279, %v277
    %v338 = vpack.c.b16 %v282, %v280
    %v339 = vpack.c.b16 %v283, %v281
    %v340 = vpack.c.b16 %v286, %v284
    %v341 = vpack.c.b16 %v287, %v285
    %v342 = vpack.c.b16 %v290, %v288
    %v343 = vpack.c.b16 %v291, %v289
    %v344 = vpack.c.b16 %v294, %v292
    %v345 = vpack.c.b16 %v295, %v293
    %v346 = vpack.c.b16 %v298, %v296
    %v347 = vpack.c.b16 %v299, %v297
    %v348 = vpack.c.b16 %v302, %v300
    %v349 = vpack.c.b16 %v303, %v301
    %v350 = vpack.c.b16 %v306, %v304
    %v351 = vpack.c.b16 %v307, %v305
    %v352 = vpack.c.b16 %v310, %v308
    %v353 = vpack.c.b16 %v311, %v309
    %v354 = vpack.c.b16 %v314, %v312
    %v355 = vpack.c.b16 %v315, %v313
    %v356 = vpack.c.b16 %v318, %v316
    %v357 = vpack.c.b16 %v319, %v317
    %v358 = vpack.c.b16 %v322, %v320
    %v359 = vpack.c.b16 %v323, %v321
    %v360 = vpack.c.b16 %v326, %v324
    %v361 = vpack.c.b16 %v327, %v325
    %v362 = vpack.c.b16 %v330, %v328
    %v363 = vpack.c.b16 %v331, %v329
    %396 = vmatprep.subr.bf16.mxu0 %v347
    %397 = vmatpush1.bf16.msra.mxu0 %v346
    %398 = vmatprep.subr.bf16.mxu0 %v345
    %399 = vmatpush1.bf16.msra.mxu0 %v344
    %400 = vmatprep.subr.bf16.mxu0 %v343
    %401 = vmatpush1.bf16.msra.mxu0 %v342
    %402 = vmatprep.subr.bf16.mxu0 %v341
    %403 = vmatpush1.bf16.msra.mxu0 %v340
    %404 = vmatprep.subr.bf16.mxu0 %v339
    %405 = vmatpush1.bf16.msra.mxu0 %v338
    %406 = vmatprep.subr.bf16.mxu0 %v337
    %407 = vmatpush1.bf16.msra.mxu0 %v336
    %408 = vmatprep.subr.bf16.mxu0 %v335
    %409 = vmatpush1.bf16.msra.mxu0 %v334
    %410 = vmatprep.subr.bf16.mxu0 %v333
    %411 = vmatpush1.bf16.msra.mxu0 %v332
    %412 = vmatprep.subr.bf16.mxu0 %v363
    %413 = vmatpush2.bf16.msra.mxu0 %v362
    %414 = vmatprep.subr.bf16.mxu0 %v361
    %415 = vmatpush2.bf16.msra.mxu0 %v360
    %416 = vmatprep.subr.bf16.mxu0 %v359
    %417 = vmatpush2.bf16.msra.mxu0 %v358
    %418 = vmatprep.subr.bf16.mxu0 %v357
    %419 = vmatpush2.bf16.msra.mxu0 %v356
    %420 = vmatprep.subr.bf16.mxu0 %v355
    %421 = vmatpush2.bf16.msra.mxu0 %v354
    %422 = vmatprep.subr.bf16.mxu0 %v353
    %423 = vmatpush2.bf16.msra.mxu0 %v352
    %424 = vmatprep.subr.bf16.mxu0 %v351
    %425 = vmatpush2.bf16.msra.mxu0 %v350
    %426 = vmatprep.subr.bf16.mxu0 %v349
    %427 = vmatpush2.bf16.msra.mxu0 %v348
    %428 = vmatprep.mubr.bf16.mxu0 %v191
    %429 = vmatmul.mubr.bf16.gmra.mxu0 %v190
    %v430 = vpop.f32.mrf.mxu0
    %v431 = vadd.f32 %v229, %v430
    %v432 = vpop.f32.mrf.mxu0
    %v433 = vadd.f32 %v233, %v432
    %v434 = vpop.f32.mrf.mxu0
    %v435 = vpop.f32.mrf.mxu0
    %436 = vdwg.mxu0
    %v437 = vmax.f32 %v431, 0.0
    %v438 = vmax.f32 %v433, 0.0
    %v439 = vpack.c.bf16 %v437, %v437
    %v440 = vpack.c.bf16 %v438, %v438
    %v441 = vld [vmem:[#allocation8] sm:$0xff]
    %v442 = vld [vmem:[#allocation8 + $0x8] sm:$0xff]
    %v443 = vld [vmem:[#allocation8 + $0x10] sm:$0xff]
    %v444 = vld [vmem:[#allocation8 + $0x18] sm:$0xff]
    %v445 = vld [vmem:[#allocation8 + $0x20] sm:$0xff]
    %v446 = vld [vmem:[#allocation8 + $0x28] sm:$0xff]
    %v447 = vld [vmem:[#allocation8 + $0x30] sm:$0xff]
    %v448 = vld [vmem:[#allocation8 + $0x38] sm:$0xff]
    %v449 = vld [vmem:[#allocation8 + $0x40] sm:$0xff]
    %v450 = vld [vmem:[#allocation8 + $0x48] sm:$0xff]
    %v451 = vld [vmem:[#allocation8 + $0x50] sm:$0xff]
    %v452 = vld [vmem:[#allocation8 + $0x58] sm:$0xff]
    %v453 = vld [vmem:[#allocation8 + $0x60] sm:$0xff]
    %v454 = vld [vmem:[#allocation8 + $0x68] sm:$0xff]
    %v455 = vld [vmem:[#allocation8 + $0x70] sm:$0xff]
    %v456 = vld [vmem:[#allocation8 + $0x78] sm:$0xff]
    %v457 = vld [vmem:[#allocation8 + $0x80] sm:$0xff]
    %v458 = vld [vmem:[#allocation8 + $0x88] sm:$0xff]
    %v459 = vld [vmem:[#allocation8 + $0x90] sm:$0xff]
    %v460 = vld [vmem:[#allocation8 + $0x98] sm:$0xff]
    %v461 = vld [vmem:[#allocation8 + $0xa0] sm:$0xff]
    %v462 = vld [vmem:[#allocation8 + $0xa8] sm:$0xff]
    %v463 = vld [vmem:[#allocation8 + $0xb0] sm:$0xff]
    %v464 = vld [vmem:[#allocation8 + $0xb8] sm:$0xff]
    %v465 = vld [vmem:[#allocation8 + $0xc0] sm:$0xff]
    %v466 = vld [vmem:[#allocation8 + $0xc8] sm:$0xff]
    %v467 = vld [vmem:[#allocation8 + $0xd0] sm:$0xff]
    %v468 = vld [vmem:[#allocation8 + $0xd8] sm:$0xff]
    %v469 = vld [vmem:[#allocation8 + $0xe0] sm:$0xff]
    %v470 = vld [vmem:[#allocation8 + $0xe8] sm:$0xff]
    %v471 = vld [vmem:[#allocation8 + $0xf0] sm:$0xff]
    %v472 = vld [vmem:[#allocation8 + $0xf8] sm:$0xff]
    %v473 = vld [vmem:[%s6] sm:$0x3]
    %v475 = vlaneseq
    %v476 = vshrl.u32 %v475, 7
    %v477 = vsub.s32 0, %v476
    %v478 = vrot.slane %v473, %v477
    %v479 = vlaneseq
    %v480 = vshrl.u32 %v479, 7
    %v481 = vsub.s32 1, %v480
    %v482 = vrot.slane %v473, %v481
    %v517 = vunpack.c.l.b16 %v441
    %v518 = vunpack.c.h.b16 %v441
    %v519 = vunpack.c.l.b16 %v442
    %v520 = vunpack.c.h.b16 %v442
    %v521 = vunpack.c.l.b16 %v443
    %v522 = vunpack.c.h.b16 %v443
    %v523 = vunpack.c.l.b16 %v444
    %v524 = vunpack.c.h.b16 %v444
    %v525 = vunpack.c.l.b16 %v445
    %v526 = vunpack.c.h.b16 %v445
    %v527 = vunpack.c.l.b16 %v446
    %v528 = vunpack.c.h.b16 %v446
    %v529 = vunpack.c.l.b16 %v447
    %v530 = vunpack.c.h.b16 %v447
    %v531 = vunpack.c.l.b16 %v448
    %v532 = vunpack.c.h.b16 %v448
    %v533 = vunpack.c.l.b16 %v449
    %v534 = vunpack.c.h.b16 %v449
    %v535 = vunpack.c.l.b16 %v450
    %v536 = vunpack.c.h.b16 %v450
    %v537 = vunpack.c.l.b16 %v451
    %v538 = vunpack.c.h.b16 %v451
    %v539 = vunpack.c.l.b16 %v452
    %v540 = vunpack.c.h.b16 %v452
    %v541 = vunpack.c.l.b16 %v453
    %v542 = vunpack.c.h.b16 %v453
    %v543 = vunpack.c.l.b16 %v454
    %v544 = vunpack.c.h.b16 %v454
    %v545 = vunpack.c.l.b16 %v455
    %v546 = vunpack.c.h.b16 %v455
    %v547 = vunpack.c.l.b16 %v456
    %v548 = vunpack.c.h.b16 %v456
    %v549 = vunpack.c.l.b16 %v457
    %v550 = vunpack.c.h.b16 %v457
    %v551 = vunpack.c.l.b16 %v458
    %v552 = vunpack.c.h.b16 %v458
    %v553 = vunpack.c.l.b16 %v459
    %v554 = vunpack.c.h.b16 %v459
    %v555 = vunpack.c.l.b16 %v460
    %v556 = vunpack.c.h.b16 %v460
    %v557 = vunpack.c.l.b16 %v461
    %v558 = vunpack.c.h.b16 %v461
    %v559 = vunpack.c.l.b16 %v462
    %v560 = vunpack.c.h.b16 %v462
    %v561 = vunpack.c.l.b16 %v463
    %v562 = vunpack.c.h.b16 %v463
    %v563 = vunpack.c.l.b16 %v464
    %v564 = vunpack.c.h.b16 %v464
    %v565 = vunpack.c.l.b16 %v465
    %v566 = vunpack.c.h.b16 %v465
    %v567 = vunpack.c.l.b16 %v466
    %v568 = vunpack.c.h.b16 %v466
    %v569 = vunpack.c.l.b16 %v467
    %v570 = vunpack.c.h.b16 %v467
    %v571 = vunpack.c.l.b16 %v468
    %v572 = vunpack.c.h.b16 %v468
    %v573 = vunpack.c.l.b16 %v469
    %v574 = vunpack.c.h.b16 %v469
    %v575 = vunpack.c.l.b16 %v470
    %v576 = vunpack.c.h.b16 %v470
    %v577 = vunpack.c.l.b16 %v471
    %v578 = vunpack.c.h.b16 %v471
    %v579 = vunpack.c.l.b16 %v472
    %v580 = vunpack.c.h.b16 %v472
    %v581 = vpack.c.b16 %v519, %v517
    %v582 = vpack.c.b16 %v520, %v518
    %v583 = vpack.c.b16 %v523, %v521
    %v584 = vpack.c.b16 %v524, %v522
    %v585 = vpack.c.b16 %v527, %v525
    %v586 = vpack.c.b16 %v528, %v526
    %v587 = vpack.c.b16 %v531, %v529
    %v588 = vpack.c.b16 %v532, %v530
    %v589 = vpack.c.b16 %v535, %v533
    %v590 = vpack.c.b16 %v536, %v534
    %v591 = vpack.c.b16 %v539, %v537
    %v592 = vpack.c.b16 %v540, %v538
    %v593 = vpack.c.b16 %v543, %v541
    %v594 = vpack.c.b16 %v544, %v542
    %v595 = vpack.c.b16 %v547, %v545
    %v596 = vpack.c.b16 %v548, %v546
    %v597 = vpack.c.b16 %v551, %v549
    %v598 = vpack.c.b16 %v552, %v550
    %v599 = vpack.c.b16 %v555, %v553
    %v600 = vpack.c.b16 %v556, %v554
    %v601 = vpack.c.b16 %v559, %v557
    %v602 = vpack.c.b16 %v560, %v558
    %v603 = vpack.c.b16 %v563, %v561
    %v604 = vpack.c.b16 %v564, %v562
    %v605 = vpack.c.b16 %v567, %v565
    %v606 = vpack.c.b16 %v568, %v566
    %v607 = vpack.c.b16 %v571, %v569
    %v608 = vpack.c.b16 %v572, %v570
    %v609 = vpack.c.b16 %v575, %v573
    %v610 = vpack.c.b16 %v576, %v574
    %v611 = vpack.c.b16 %v579, %v577
    %v612 = vpack.c.b16 %v580, %v578
    %645 = vmatprep.subr.bf16.mxu0 %v596
    %646 = vmatpush1.bf16.msra.mxu0 %v595
    %647 = vmatprep.subr.bf16.mxu0 %v594
    %648 = vmatpush1.bf16.msra.mxu0 %v593
    %649 = vmatprep.subr.bf16.mxu0 %v592
    %650 = vmatpush1.bf16.msra.mxu0 %v591
    %651 = vmatprep.subr.bf16.mxu0 %v590
    %652 = vmatpush1.bf16.msra.mxu0 %v589
    %653 = vmatprep.subr.bf16.mxu0 %v588
    %654 = vmatpush1.bf16.msra.mxu0 %v587
    %655 = vmatprep.subr.bf16.mxu0 %v586
    %656 = vmatpush1.bf16.msra.mxu0 %v585
    %657 = vmatprep.subr.bf16.mxu0 %v584
    %658 = vmatpush1.bf16.msra.mxu0 %v583
    %659 = vmatprep.subr.bf16.mxu0 %v582
    %660 = vmatpush1.bf16.msra.mxu0 %v581
    %661 = vmatprep.subr.bf16.mxu0 %v612
    %662 = vmatpush2.bf16.msra.mxu0 %v611
    %663 = vmatprep.subr.bf16.mxu0 %v610
    %664 = vmatpush2.bf16.msra.mxu0 %v609
    %665 = vmatprep.subr.bf16.mxu0 %v608
    %666 = vmatpush2.bf16.msra.mxu0 %v607
    %667 = vmatprep.subr.bf16.mxu0 %v606
    %668 = vmatpush2.bf16.msra.mxu0 %v605
    %669 = vmatprep.subr.bf16.mxu0 %v604
    %670 = vmatpush2.bf16.msra.mxu0 %v603
    %671 = vmatprep.subr.bf16.mxu0 %v602
    %672 = vmatpush2.bf16.msra.mxu0 %v601
    %673 = vmatprep.subr.bf16.mxu0 %v600
    %674 = vmatpush2.bf16.msra.mxu0 %v599
    %675 = vmatprep.subr.bf16.mxu0 %v598
    %676 = vmatpush2.bf16.msra.mxu0 %v597
    %677 = vmatprep.mubr.bf16.mxu0 %v440
    %678 = vmatmul.mubr.bf16.gmra.mxu0 %v439
    %v679 = vpop.f32.mrf.mxu0
    %v680 = vadd.f32 %v478, %v679
    %v681 = vpop.f32.mrf.mxu0
    %v682 = vadd.f32 %v482, %v681
    %v683 = vpop.f32.mrf.mxu0
    %v684 = vpop.f32.mrf.mxu0
    %685 = vdwg.mxu0
    %v686 = vmax.f32 %v680, 0.0
    %v687 = vmax.f32 %v682, 0.0
    %v688 = vpack.c.bf16 %v686, %v686
    %v689 = vpack.c.bf16 %v687, %v687
    %v690 = vld [vmem:[#allocation10] sm:$0xf]
    %v691 = vld [vmem:[#allocation10 + $0x4] sm:$0xf]
    %v692 = vld [vmem:[#allocation10 + $0x8] sm:$0xf]
    %v693 = vld [vmem:[#allocation10 + $0xc] sm:$0xf]
    %v694 = vld [vmem:[#allocation10 + $0x10] sm:$0xf]
    %v695 = vld [vmem:[#allocation10 + $0x14] sm:$0xf]
    %v696 = vld [vmem:[#allocation10 + $0x18] sm:$0xf]
    %v697 = vld [vmem:[#allocation10 + $0x1c] sm:$0xf]
    %v698 = vld [vmem:[#allocation10 + $0x20] sm:$0xf]
    %v699 = vld [vmem:[#allocation10 + $0x24] sm:$0xf]
    %v700 = vld [vmem:[#allocation10 + $0x28] sm:$0xf]
    %v701 = vld [vmem:[#allocation10 + $0x2c] sm:$0xf]
    %v702 = vld [vmem:[#allocation10 + $0x30] sm:$0xf]
    %v703 = vld [vmem:[#allocation10 + $0x34] sm:$0xf]
    %v704 = vld [vmem:[#allocation10 + $0x38] sm:$0xf]
    %v705 = vld [vmem:[#allocation10 + $0x3c] sm:$0xf]
    %v706 = vld [vmem:[#allocation10 + $0x40] sm:$0xf]
    %v707 = vld [vmem:[#allocation10 + $0x44] sm:$0xf]
    %v708 = vld [vmem:[#allocation10 + $0x48] sm:$0xf]
    %v709 = vld [vmem:[#allocation10 + $0x4c] sm:$0xf]
    %v710 = vld [vmem:[#allocation10 + $0x50] sm:$0xf]
    %v711 = vld [vmem:[#allocation10 + $0x54] sm:$0xf]
    %v712 = vld [vmem:[#allocation10 + $0x58] sm:$0xf]
    %v713 = vld [vmem:[#allocation10 + $0x5c] sm:$0xf]
    %v714 = vld [vmem:[#allocation10 + $0x60] sm:$0xf]
    %v715 = vld [vmem:[#allocation10 + $0x64] sm:$0xf]
    %v716 = vld [vmem:[#allocation10 + $0x68] sm:$0xf]
    %v717 = vld [vmem:[#allocation10 + $0x6c] sm:$0xf]
    %v718 = vld [vmem:[#allocation10 + $0x70] sm:$0xf]
    %v719 = vld [vmem:[#allocation10 + $0x74] sm:$0xf]
    %v720 = vld [vmem:[#allocation10 + $0x78] sm:$0xf]
    %v721 = vld [vmem:[#allocation10 + $0x7c] sm:$0xf]
    %v722 = vld [vmem:[%s8] sm:$0x1]
    %v724 = vlaneseq
    %v725 = vshrl.u32 %v724, 7
    %v726 = vsub.s32 0, %v725
    %v727 = vrot.slane %v722, %v726
    %v761 = vunpack.c.l.b16 %v690
    %v762 = vunpack.c.l.b16 %v691
    %v763 = vunpack.c.l.b16 %v692
    %v764 = vunpack.c.l.b16 %v693
    %v765 = vunpack.c.l.b16 %v694
    %v766 = vunpack.c.l.b16 %v695
    %v767 = vunpack.c.l.b16 %v696
    %v768 = vunpack.c.l.b16 %v697
    %v769 = vunpack.c.l.b16 %v698
    %v770 = vunpack.c.l.b16 %v699
    %v771 = vunpack.c.l.b16 %v700
    %v772 = vunpack.c.l.b16 %v701
    %v773 = vunpack.c.l.b16 %v702
    %v774 = vunpack.c.l.b16 %v703
    %v775 = vunpack.c.l.b16 %v704
    %v776 = vunpack.c.l.b16 %v705
    %v777 = vunpack.c.l.b16 %v706
    %v778 = vunpack.c.l.b16 %v707
    %v779 = vunpack.c.l.b16 %v708
    %v780 = vunpack.c.l.b16 %v709
    %v781 = vunpack.c.l.b16 %v710
    %v782 = vunpack.c.l.b16 %v711
    %v783 = vunpack.c.l.b16 %v712
    %v784 = vunpack.c.l.b16 %v713
    %v785 = vunpack.c.l.b16 %v714
    %v786 = vunpack.c.l.b16 %v715
    %v787 = vunpack.c.l.b16 %v716
    %v788 = vunpack.c.l.b16 %v717
    %v789 = vunpack.c.l.b16 %v718
    %v790 = vunpack.c.l.b16 %v719
    %v791 = vunpack.c.l.b16 %v720
    %v792 = vunpack.c.l.b16 %v721
    %v793 = vpack.c.b16 %v762, %v761
    %v794 = vpack.c.b16 %v764, %v763
    %v795 = vpack.c.b16 %v766, %v765
    %v796 = vpack.c.b16 %v768, %v767
    %v797 = vpack.c.b16 %v770, %v769
    %v798 = vpack.c.b16 %v772, %v771
    %v799 = vpack.c.b16 %v774, %v773
    %v800 = vpack.c.b16 %v776, %v775
    %v801 = vpack.c.b16 %v778, %v777
    %v802 = vpack.c.b16 %v780, %v779
    %v803 = vpack.c.b16 %v782, %v781
    %v804 = vpack.c.b16 %v784, %v783
    %v805 = vpack.c.b16 %v786, %v785
    %v806 = vpack.c.b16 %v788, %v787
    %v807 = vpack.c.b16 %v790, %v789
    %v808 = vpack.c.b16 %v792, %v791
    %825 = vmatprep.subr.bf16.mxu0 0
    %826 = vmatpush1.bf16.msra.mxu0 %v800
    %827 = vmatprep.subr.bf16.mxu0 0
    %828 = vmatpush1.bf16.msra.mxu0 %v799
    %829 = vmatprep.subr.bf16.mxu0 0
    %830 = vmatpush1.bf16.msra.mxu0 %v798
    %831 = vmatprep.subr.bf16.mxu0 0
    %832 = vmatpush1.bf16.msra.mxu0 %v797
    %833 = vmatprep.subr.bf16.mxu0 0
    %834 = vmatpush1.bf16.msra.mxu0 %v796
    %835 = vmatprep.subr.bf16.mxu0 0
    %836 = vmatpush1.bf16.msra.mxu0 %v795
    %837 = vmatprep.subr.bf16.mxu0 0
    %838 = vmatpush1.bf16.msra.mxu0 %v794
    %839 = vmatprep.subr.bf16.mxu0 0
    %840 = vmatpush1.bf16.msra.mxu0 %v793
    %841 = vmatprep.subr.bf16.mxu0 0
    %842 = vmatpush2.bf16.msra.mxu0 %v808
    %843 = vmatprep.subr.bf16.mxu0 0
    %844 = vmatpush2.bf16.msra.mxu0 %v807
    %845 = vmatprep.subr.bf16.mxu0 0
    %846 = vmatpush2.bf16.msra.mxu0 %v806
    %847 = vmatprep.subr.bf16.mxu0 0
    %848 = vmatpush2.bf16.msra.mxu0 %v805
    %849 = vmatprep.subr.bf16.mxu0 0
    %850 = vmatpush2.bf16.msra.mxu0 %v804
    %851 = vmatprep.subr.bf16.mxu0 0
    %852 = vmatpush2.bf16.msra.mxu0 %v803
    %853 = vmatprep.subr.bf16.mxu0 0
    %854 = vmatpush2.bf16.msra.mxu0 %v802
    %855 = vmatprep.subr.bf16.mxu0 0
    %856 = vmatpush2.bf16.msra.mxu0 %v801
    %857 = vmatprep.mubr.bf16.mxu0 %v689
    %858 = vmatmul.mubr.bf16.gmra.mxu0 %v688
    %v859 = vpop.f32.mrf.mxu0
    %v860 = vadd.f32 %v727, %v859
    %v861 = vpop.f32.mrf.mxu0
    %v862 = vpop.f32.mrf.mxu0
    %v863 = vpop.f32.mrf.mxu0
    %864 = vdwg.mxu0
    %865 = vst [vmem:[#allocation11] sm:$0xff] %v860
    // Predicated region
    $region58: #{tpu_custom_call.1} parent=1 // pred_check
      _
    $region59: #{tpu_custom_call.1} parent=1 // pred_check_branch
      %867 = sbr.rel (0) target = $region61
    $region60: #{tpu_custom_call.1} parent=1 // pred_region
      %s869 = ssub.s32 128, 128
      %870 = vsyncadd [#allocation4], %s869
      %s872 = sshll.u32 [#allocation11], 4
      %s873 = int_to_ptr.vmem [resolvable:$true] %s872
      %875 = dma.vmem_to_hbm [thread:$0]  %s873, 128, %s9, [#allocation4]
    $region61: #{tpu_custom_call.1} parent=1 // pred_fallthru
      _
    // Predicated region
    $region62: #{tpu_custom_call.1} parent=1 // pred_check
      _
    $region63: #{tpu_custom_call.1} parent=1 // pred_check_branch
      %877 = sbr.rel (0) target = $region65
    $region64: #{tpu_custom_call.1} parent=1 // pred_region
      %878 = dma.done [#allocation4], 128
    $region65: #{tpu_custom_call.1} parent=1 // pred_fallthru
      _
    %879 = vsyncpa [#allocation3], 1
    %880 = vsyncpa [#allocation6], 1
    %881 = vsyncpa [#allocation9], 1
    %882 = vsyncpa [#allocation4], 1

</llo_original>
